<compile_context>
chip_gen: v6e
topology: v6e:2x2x1
jax: 0.10.0
libtpu: 0.0.40
codegen_flags: <defaults>
</compile_context>

<pallas_src>
import functools

import jax
import jax.numpy as jnp
from jax.experimental import pallas as pl
from jax.experimental.pallas import tpu as pltpu


def _round_up(n: int, m: int) -> int:
    return ((n + m - 1) // m) * m


def _center_loss_kernel(labels_ref, x_ref, centers_hbm, out_ref, cbuf, sems, *, tb):
    """One batch tile.

    Gathers each sample's own class-center row straight from HBM (tb row
    DMAs, tb*D*4 bytes total) into a VMEM buffer, then emits per-sample
    squared distances ||x_i - c_{y_i}||^2.  No distmat, no one-hot matmul,
    no full-centers streaming.
    """
    bi = pl.program_id(0)
    base = bi * tb

    # Issue all row-gather DMAs up front so they overlap each other.
    for j in range(tb):
        lab = labels_ref[base + j]                       # dynamic SMEM read
        pltpu.make_async_copy(
            centers_hbm.at[pl.ds(lab, 1), :],            # (1, D) row in HBM
            cbuf.at[pl.ds(j, 1), :],                     # (1, D) slot in VMEM
            sems.at[j],
        ).start()

    # Wait for all gathers (descriptor src only needs matching shape).
    for j in range(tb):
        pltpu.make_async_copy(
            centers_hbm.at[pl.ds(0, 1), :],
            cbuf.at[pl.ds(j, 1), :],
            sems.at[j],
        ).wait()

    diff = x_ref[...].astype(jnp.float32) - cbuf[...]    # (tb, D)
    out_ref[...] = jnp.sum(diff * diff, axis=1, keepdims=True)   # (tb, 1)


def center_loss(x, centers, labels, *, tb_cap=64):
    """x: (B, D), centers: (C, D), labels: (B,) int -> scalar f32 loss."""
    B, D = x.shape
    C, D2 = centers.shape
    assert D == D2, (D, D2)

    x = x.astype(jnp.float32)
    centers = centers.astype(jnp.float32)
    labels = labels.astype(jnp.int32)

    # Batch tile: multiple of 8 (sublane constraint), capped to bound the
    # per-tile DMA unroll / semaphore count.  VMEM use ~3*TB*D*4 bytes.
    TB = min(_round_up(tb_cap, 8), _round_up(B, 8))
    B_pad = _round_up(B, TB)
    if B_pad != B:
        x = jnp.pad(x, ((0, B_pad - B), (0, 0)))
        labels = jnp.pad(labels, (0, B_pad - B))          # pad with class 0 (in range)
    nb = B_pad // TB

    kernel = functools.partial(_center_loss_kernel, tb=TB)

    per_sample = pl.pallas_call(
        kernel,
        out_shape=jax.ShapeDtypeStruct((B_pad, 1), jnp.float32),
        grid_spec=pltpu.PrefetchScalarGridSpec(
            num_scalar_prefetch=1,                        # labels -> SMEM
            grid=(nb,),
            in_specs=[
                pl.BlockSpec((TB, D), lambda bi, labels: (bi, 0)),  # x tile (pipelined)
                pl.BlockSpec(memory_space=pl.ANY),                  # centers stay in HBM
            ],
            out_specs=pl.BlockSpec((TB, 1), lambda bi, labels: (bi, 0)),
            scratch_shapes=[
                pltpu.VMEM((TB, D), jnp.float32),         # gathered center rows
                pltpu.SemaphoreType.DMA((TB,)),           # one sem per row DMA
            ],
        ),
        compiler_params=pltpu.CompilerParams(
            # Grid steps are fully independent (disjoint output blocks,
            # no carried scratch state) -> megacore-shardable on v7x.
            dimension_semantics=("parallel",),
        ),
    )(labels, x, centers)

    # Exactly the torch forward: per-sample clamp, then mean over the batch.
    dist = jnp.clip(per_sample[:B, 0], 1e-12, 1e12)
    return jnp.mean(dist)


def center_loss_ref(x, centers, labels):
    """Pure-JAX reference mirroring the original PyTorch forward (distmat form)."""
    C = centers.shape[0]
    distmat = (jnp.sum(x ** 2, axis=1, keepdims=True)
               + jnp.sum(centers ** 2, axis=1)[None, :]
               - 2.0 * x @ centers.T)
    mask = labels[:, None] == jnp.arange(C)[None, :]
    picked = jnp.sum(jnp.where(mask, distmat, 0.0), axis=1)
    picked = jnp.clip(picked, 1e-12, 1e12)
    return jnp.mean(picked)


if __name__ == "__main__":
    key = jax.random.PRNGKey(0)
    k_x, k_c, k_l = jax.random.split(key, 3)

    # Small but lane-dense shapes: batch=8, feat_dim=128, num_classes=16.
    B, D, C = 8, 128, 16

    x = jax.random.normal(k_x, (B, D), dtype=jnp.float32)
    centers = jax.random.normal(k_c, (C, D), dtype=jnp.float32)
    labels = jax.random.randint(k_l, (B,), 0, C, dtype=jnp.int32)

    loss = center_loss(x, centers, labels)
    jax.block_until_ready(loss)

    ref = center_loss_ref(x, centers, labels)
    assert jnp.allclose(loss, ref, rtol=1e-4, atol=1e-4), (loss, ref)

    print("KERNEL_OK")
</pallas_src>

<mosaic_0001>
module attributes {stable_mosaic.version = 11 : i64} {
  func.func @_center_loss_kernel(%arg0: i32, %arg1: memref<8xi32, #tpu.memory_space<smem>>, %arg2: memref<8x128xf32, #tpu.memory_space<vmem>>, %arg3: memref<16x128xf32, #tpu.memory_space<any>>, %arg4: memref<8x1xf32, #tpu.memory_space<vmem>>, %arg5: memref<8x128xf32, #tpu.memory_space<vmem>>, %arg6: memref<8x!tpu.dma_semaphore, #tpu.memory_space<semaphore_mem>>) attributes {dimension_semantics = [#tpu.dimension_semantics<parallel>], iteration_bounds = array<i64: 1>, scalar_prefetch = 1 : i64, scratch_operands = 2 : i64, tpu.core_type = #tpu.core_type<tc>, window_params = [{transform_indices = @transform_0, window_bounds = array<i64: 8, 128>}, {}, {transform_indices = @transform_2, window_bounds = array<i64: 8, 1>}]} {
    %c8_i32 = arith.constant 8 : i32
    %0 = arith.muli %arg0, %c8_i32 : i32
    %c0_i32 = arith.constant 0 : i32
    %1 = arith.addi %0, %c0_i32 : i32
    %2 = arith.index_cast %1 : i32 to index
    %3 = memref.load %arg1[%2] : memref<8xi32, #tpu.memory_space<smem>>
    %c0_i32_0 = arith.constant 0 : i32
    %c0_i32_1 = arith.constant 0 : i32
    %4 = tpu.memref_slice %arg3[%3, %c0_i32_1] : memref<16x128xf32, #tpu.memory_space<any>> -> memref<1x128xf32, #tpu.memory_space<any>>
    %c0_i32_2 = arith.constant 0 : i32
    %c0_i32_3 = arith.constant 0 : i32
    %5 = tpu.memref_slice %arg5[%c0_i32_2, %c0_i32_3] : memref<8x128xf32, #tpu.memory_space<vmem>> -> memref<1x128xf32, #tpu.memory_space<vmem>>
    %6 = tpu.memref_slice %arg6[%c0_i32_0] : memref<8x!tpu.dma_semaphore, #tpu.memory_space<semaphore_mem>> -> memref<1x!tpu.dma_semaphore, #tpu.memory_space<semaphore_mem>>
    %7 = tpu.memref_squeeze %6 : memref<1x!tpu.dma_semaphore, #tpu.memory_space<semaphore_mem>> -> memref<!tpu.dma_semaphore, #tpu.memory_space<semaphore_mem>>
    tpu.enqueue_dma source(%4 : memref<1x128xf32, #tpu.memory_space<any>>) target(%5 : memref<1x128xf32, #tpu.memory_space<vmem>>) target_semaphore(%7 : memref<!tpu.dma_semaphore, #tpu.memory_space<semaphore_mem>>)
    %c1_i32 = arith.constant 1 : i32
    %8 = arith.addi %0, %c1_i32 : i32
    %9 = arith.index_cast %8 : i32 to index
    %10 = memref.load %arg1[%9] : memref<8xi32, #tpu.memory_space<smem>>
    %c1_i32_4 = arith.constant 1 : i32
    %c0_i32_5 = arith.constant 0 : i32
    %11 = tpu.memref_slice %arg3[%10, %c0_i32_5] : memref<16x128xf32, #tpu.memory_space<any>> -> memref<1x128xf32, #tpu.memory_space<any>>
    %c1_i32_6 = arith.constant 1 : i32
    %c0_i32_7 = arith.constant 0 : i32
    %12 = tpu.memref_slice %arg5[%c1_i32_6, %c0_i32_7] : memref<8x128xf32, #tpu.memory_space<vmem>> -> memref<1x128xf32, #tpu.memory_space<vmem>>
    %13 = tpu.memref_slice %arg6[%c1_i32_4] : memref<8x!tpu.dma_semaphore, #tpu.memory_space<semaphore_mem>> -> memref<1x!tpu.dma_semaphore, #tpu.memory_space<semaphore_mem>>
    %14 = tpu.memref_squeeze %13 : memref<1x!tpu.dma_semaphore, #tpu.memory_space<semaphore_mem>> -> memref<!tpu.dma_semaphore, #tpu.memory_space<semaphore_mem>>
    tpu.enqueue_dma source(%11 : memref<1x128xf32, #tpu.memory_space<any>>) target(%12 : memref<1x128xf32, #tpu.memory_space<vmem>>) target_semaphore(%14 : memref<!tpu.dma_semaphore, #tpu.memory_space<semaphore_mem>>)
    %c2_i32 = arith.constant 2 : i32
    %15 = arith.addi %0, %c2_i32 : i32
    %16 = arith.index_cast %15 : i32 to index
    %17 = memref.load %arg1[%16] : memref<8xi32, #tpu.memory_space<smem>>
    %c2_i32_8 = arith.constant 2 : i32
    %c0_i32_9 = arith.constant 0 : i32
    %18 = tpu.memref_slice %arg3[%17, %c0_i32_9] : memref<16x128xf32, #tpu.memory_space<any>> -> memref<1x128xf32, #tpu.memory_space<any>>
    %c2_i32_10 = arith.constant 2 : i32
    %c0_i32_11 = arith.constant 0 : i32
    %19 = tpu.memref_slice %arg5[%c2_i32_10, %c0_i32_11] : memref<8x128xf32, #tpu.memory_space<vmem>> -> memref<1x128xf32, #tpu.memory_space<vmem>>
    %20 = tpu.memref_slice %arg6[%c2_i32_8] : memref<8x!tpu.dma_semaphore, #tpu.memory_space<semaphore_mem>> -> memref<1x!tpu.dma_semaphore, #tpu.memory_space<semaphore_mem>>
    %21 = tpu.memref_squeeze %20 : memref<1x!tpu.dma_semaphore, #tpu.memory_space<semaphore_mem>> -> memref<!tpu.dma_semaphore, #tpu.memory_space<semaphore_mem>>
    tpu.enqueue_dma source(%18 : memref<1x128xf32, #tpu.memory_space<any>>) target(%19 : memref<1x128xf32, #tpu.memory_space<vmem>>) target_semaphore(%21 : memref<!tpu.dma_semaphore, #tpu.memory_space<semaphore_mem>>)
    %c3_i32 = arith.constant 3 : i32
    %22 = arith.addi %0, %c3_i32 : i32
    %23 = arith.index_cast %22 : i32 to index
    %24 = memref.load %arg1[%23] : memref<8xi32, #tpu.memory_space<smem>>
    %c3_i32_12 = arith.constant 3 : i32
    %c0_i32_13 = arith.constant 0 : i32
    %25 = tpu.memref_slice %arg3[%24, %c0_i32_13] : memref<16x128xf32, #tpu.memory_space<any>> -> memref<1x128xf32, #tpu.memory_space<any>>
    %c3_i32_14 = arith.constant 3 : i32
    %c0_i32_15 = arith.constant 0 : i32
    %26 = tpu.memref_slice %arg5[%c3_i32_14, %c0_i32_15] : memref<8x128xf32, #tpu.memory_space<vmem>> -> memref<1x128xf32, #tpu.memory_space<vmem>>
    %27 = tpu.memref_slice %arg6[%c3_i32_12] : memref<8x!tpu.dma_semaphore, #tpu.memory_space<semaphore_mem>> -> memref<1x!tpu.dma_semaphore, #tpu.memory_space<semaphore_mem>>
    %28 = tpu.memref_squeeze %27 : memref<1x!tpu.dma_semaphore, #tpu.memory_space<semaphore_mem>> -> memref<!tpu.dma_semaphore, #tpu.memory_space<semaphore_mem>>
    tpu.enqueue_dma source(%25 : memref<1x128xf32, #tpu.memory_space<any>>) target(%26 : memref<1x128xf32, #tpu.memory_space<vmem>>) target_semaphore(%28 : memref<!tpu.dma_semaphore, #tpu.memory_space<semaphore_mem>>)
    %c4_i32 = arith.constant 4 : i32
    %29 = arith.addi %0, %c4_i32 : i32
    %30 = arith.index_cast %29 : i32 to index
    %31 = memref.load %arg1[%30] : memref<8xi32, #tpu.memory_space<smem>>
    %c4_i32_16 = arith.constant 4 : i32
    %c0_i32_17 = arith.constant 0 : i32
    %32 = tpu.memref_slice %arg3[%31, %c0_i32_17] : memref<16x128xf32, #tpu.memory_space<any>> -> memref<1x128xf32, #tpu.memory_space<any>>
    %c4_i32_18 = arith.constant 4 : i32
    %c0_i32_19 = arith.constant 0 : i32
    %33 = tpu.memref_slice %arg5[%c4_i32_18, %c0_i32_19] : memref<8x128xf32, #tpu.memory_space<vmem>> -> memref<1x128xf32, #tpu.memory_space<vmem>>
    %34 = tpu.memref_slice %arg6[%c4_i32_16] : memref<8x!tpu.dma_semaphore, #tpu.memory_space<semaphore_mem>> -> memref<1x!tpu.dma_semaphore, #tpu.memory_space<semaphore_mem>>
    %35 = tpu.memref_squeeze %34 : memref<1x!tpu.dma_semaphore, #tpu.memory_space<semaphore_mem>> -> memref<!tpu.dma_semaphore, #tpu.memory_space<semaphore_mem>>
    tpu.enqueue_dma source(%32 : memref<1x128xf32, #tpu.memory_space<any>>) target(%33 : memref<1x128xf32, #tpu.memory_space<vmem>>) target_semaphore(%35 : memref<!tpu.dma_semaphore, #tpu.memory_space<semaphore_mem>>)
    %c5_i32 = arith.constant 5 : i32
    %36 = arith.addi %0, %c5_i32 : i32
    %37 = arith.index_cast %36 : i32 to index
    %38 = memref.load %arg1[%37] : memref<8xi32, #tpu.memory_space<smem>>
    %c5_i32_20 = arith.constant 5 : i32
    %c0_i32_21 = arith.constant 0 : i32
    %39 = tpu.memref_slice %arg3[%38, %c0_i32_21] : memref<16x128xf32, #tpu.memory_space<any>> -> memref<1x128xf32, #tpu.memory_space<any>>
    %c5_i32_22 = arith.constant 5 : i32
    %c0_i32_23 = arith.constant 0 : i32
    %40 = tpu.memref_slice %arg5[%c5_i32_22, %c0_i32_23] : memref<8x128xf32, #tpu.memory_space<vmem>> -> memref<1x128xf32, #tpu.memory_space<vmem>>
    %41 = tpu.memref_slice %arg6[%c5_i32_20] : memref<8x!tpu.dma_semaphore, #tpu.memory_space<semaphore_mem>> -> memref<1x!tpu.dma_semaphore, #tpu.memory_space<semaphore_mem>>
    %42 = tpu.memref_squeeze %41 : memref<1x!tpu.dma_semaphore, #tpu.memory_space<semaphore_mem>> -> memref<!tpu.dma_semaphore, #tpu.memory_space<semaphore_mem>>
    tpu.enqueue_dma source(%39 : memref<1x128xf32, #tpu.memory_space<any>>) target(%40 : memref<1x128xf32, #tpu.memory_space<vmem>>) target_semaphore(%42 : memref<!tpu.dma_semaphore, #tpu.memory_space<semaphore_mem>>)
    %c6_i32 = arith.constant 6 : i32
    %43 = arith.addi %0, %c6_i32 : i32
    %44 = arith.index_cast %43 : i32 to index
    %45 = memref.load %arg1[%44] : memref<8xi32, #tpu.memory_space<smem>>
    %c6_i32_24 = arith.constant 6 : i32
    %c0_i32_25 = arith.constant 0 : i32
    %46 = tpu.memref_slice %arg3[%45, %c0_i32_25] : memref<16x128xf32, #tpu.memory_space<any>> -> memref<1x128xf32, #tpu.memory_space<any>>
    %c6_i32_26 = arith.constant 6 : i32
    %c0_i32_27 = arith.constant 0 : i32
    %47 = tpu.memref_slice %arg5[%c6_i32_26, %c0_i32_27] : memref<8x128xf32, #tpu.memory_space<vmem>> -> memref<1x128xf32, #tpu.memory_space<vmem>>
    %48 = tpu.memref_slice %arg6[%c6_i32_24] : memref<8x!tpu.dma_semaphore, #tpu.memory_space<semaphore_mem>> -> memref<1x!tpu.dma_semaphore, #tpu.memory_space<semaphore_mem>>
    %49 = tpu.memref_squeeze %48 : memref<1x!tpu.dma_semaphore, #tpu.memory_space<semaphore_mem>> -> memref<!tpu.dma_semaphore, #tpu.memory_space<semaphore_mem>>
    tpu.enqueue_dma source(%46 : memref<1x128xf32, #tpu.memory_space<any>>) target(%47 : memref<1x128xf32, #tpu.memory_space<vmem>>) target_semaphore(%49 : memref<!tpu.dma_semaphore, #tpu.memory_space<semaphore_mem>>)
    %c7_i32 = arith.constant 7 : i32
    %50 = arith.addi %0, %c7_i32 : i32
    %51 = arith.index_cast %50 : i32 to index
    %52 = memref.load %arg1[%51] : memref<8xi32, #tpu.memory_space<smem>>
    %c7_i32_28 = arith.constant 7 : i32
    %c0_i32_29 = arith.constant 0 : i32
    %53 = tpu.memref_slice %arg3[%52, %c0_i32_29] : memref<16x128xf32, #tpu.memory_space<any>> -> memref<1x128xf32, #tpu.memory_space<any>>
    %c7_i32_30 = arith.constant 7 : i32
    %c0_i32_31 = arith.constant 0 : i32
    %54 = tpu.memref_slice %arg5[%c7_i32_30, %c0_i32_31] : memref<8x128xf32, #tpu.memory_space<vmem>> -> memref<1x128xf32, #tpu.memory_space<vmem>>
    %55 = tpu.memref_slice %arg6[%c7_i32_28] : memref<8x!tpu.dma_semaphore, #tpu.memory_space<semaphore_mem>> -> memref<1x!tpu.dma_semaphore, #tpu.memory_space<semaphore_mem>>
    %56 = tpu.memref_squeeze %55 : memref<1x!tpu.dma_semaphore, #tpu.memory_space<semaphore_mem>> -> memref<!tpu.dma_semaphore, #tpu.memory_space<semaphore_mem>>
    tpu.enqueue_dma source(%53 : memref<1x128xf32, #tpu.memory_space<any>>) target(%54 : memref<1x128xf32, #tpu.memory_space<vmem>>) target_semaphore(%56 : memref<!tpu.dma_semaphore, #tpu.memory_space<semaphore_mem>>)
    %c0_i32_32 = arith.constant 0 : i32
    %c0_i32_33 = arith.constant 0 : i32
    %c0_i32_34 = arith.constant 0 : i32
    %57 = tpu.memref_slice %arg3[%c0_i32_33, %c0_i32_34] : memref<16x128xf32, #tpu.memory_space<any>> -> memref<1x128xf32, #tpu.memory_space<any>>
    %c0_i32_35 = arith.constant 0 : i32
    %c0_i32_36 = arith.constant 0 : i32
    %58 = tpu.memref_slice %arg5[%c0_i32_35, %c0_i32_36] : memref<8x128xf32, #tpu.memory_space<vmem>> -> memref<1x128xf32, #tpu.memory_space<vmem>>
    %59 = tpu.memref_slice %arg6[%c0_i32_32] : memref<8x!tpu.dma_semaphore, #tpu.memory_space<semaphore_mem>> -> memref<1x!tpu.dma_semaphore, #tpu.memory_space<semaphore_mem>>
    %60 = tpu.memref_squeeze %59 : memref<1x!tpu.dma_semaphore, #tpu.memory_space<semaphore_mem>> -> memref<!tpu.dma_semaphore, #tpu.memory_space<semaphore_mem>>
    tpu.wait_dma2 semaphore(%60 : memref<!tpu.dma_semaphore, #tpu.memory_space<semaphore_mem>>) src(%57 : memref<1x128xf32, #tpu.memory_space<any>>) dst(%58 : memref<1x128xf32, #tpu.memory_space<vmem>>)
    %c1_i32_37 = arith.constant 1 : i32
    %c0_i32_38 = arith.constant 0 : i32
    %c0_i32_39 = arith.constant 0 : i32
    %61 = tpu.memref_slice %arg3[%c0_i32_38, %c0_i32_39] : memref<16x128xf32, #tpu.memory_space<any>> -> memref<1x128xf32, #tpu.memory_space<any>>
    %c1_i32_40 = arith.constant 1 : i32
    %c0_i32_41 = arith.constant 0 : i32
    %62 = tpu.memref_slice %arg5[%c1_i32_40, %c0_i32_41] : memref<8x128xf32, #tpu.memory_space<vmem>> -> memref<1x128xf32, #tpu.memory_space<vmem>>
    %63 = tpu.memref_slice %arg6[%c1_i32_37] : memref<8x!tpu.dma_semaphore, #tpu.memory_space<semaphore_mem>> -> memref<1x!tpu.dma_semaphore, #tpu.memory_space<semaphore_mem>>
    %64 = tpu.memref_squeeze %63 : memref<1x!tpu.dma_semaphore, #tpu.memory_space<semaphore_mem>> -> memref<!tpu.dma_semaphore, #tpu.memory_space<semaphore_mem>>
    tpu.wait_dma2 semaphore(%64 : memref<!tpu.dma_semaphore, #tpu.memory_space<semaphore_mem>>) src(%61 : memref<1x128xf32, #tpu.memory_space<any>>) dst(%62 : memref<1x128xf32, #tpu.memory_space<vmem>>)
    %c2_i32_42 = arith.constant 2 : i32
    %c0_i32_43 = arith.constant 0 : i32
    %c0_i32_44 = arith.constant 0 : i32
    %65 = tpu.memref_slice %arg3[%c0_i32_43, %c0_i32_44] : memref<16x128xf32, #tpu.memory_space<any>> -> memref<1x128xf32, #tpu.memory_space<any>>
    %c2_i32_45 = arith.constant 2 : i32
    %c0_i32_46 = arith.constant 0 : i32
    %66 = tpu.memref_slice %arg5[%c2_i32_45, %c0_i32_46] : memref<8x128xf32, #tpu.memory_space<vmem>> -> memref<1x128xf32, #tpu.memory_space<vmem>>
    %67 = tpu.memref_slice %arg6[%c2_i32_42] : memref<8x!tpu.dma_semaphore, #tpu.memory_space<semaphore_mem>> -> memref<1x!tpu.dma_semaphore, #tpu.memory_space<semaphore_mem>>
    %68 = tpu.memref_squeeze %67 : memref<1x!tpu.dma_semaphore, #tpu.memory_space<semaphore_mem>> -> memref<!tpu.dma_semaphore, #tpu.memory_space<semaphore_mem>>
    tpu.wait_dma2 semaphore(%68 : memref<!tpu.dma_semaphore, #tpu.memory_space<semaphore_mem>>) src(%65 : memref<1x128xf32, #tpu.memory_space<any>>) dst(%66 : memref<1x128xf32, #tpu.memory_space<vmem>>)
    %c3_i32_47 = arith.constant 3 : i32
    %c0_i32_48 = arith.constant 0 : i32
    %c0_i32_49 = arith.constant 0 : i32
    %69 = tpu.memref_slice %arg3[%c0_i32_48, %c0_i32_49] : memref<16x128xf32, #tpu.memory_space<any>> -> memref<1x128xf32, #tpu.memory_space<any>>
    %c3_i32_50 = arith.constant 3 : i32
    %c0_i32_51 = arith.constant 0 : i32
    %70 = tpu.memref_slice %arg5[%c3_i32_50, %c0_i32_51] : memref<8x128xf32, #tpu.memory_space<vmem>> -> memref<1x128xf32, #tpu.memory_space<vmem>>
    %71 = tpu.memref_slice %arg6[%c3_i32_47] : memref<8x!tpu.dma_semaphore, #tpu.memory_space<semaphore_mem>> -> memref<1x!tpu.dma_semaphore, #tpu.memory_space<semaphore_mem>>
    %72 = tpu.memref_squeeze %71 : memref<1x!tpu.dma_semaphore, #tpu.memory_space<semaphore_mem>> -> memref<!tpu.dma_semaphore, #tpu.memory_space<semaphore_mem>>
    tpu.wait_dma2 semaphore(%72 : memref<!tpu.dma_semaphore, #tpu.memory_space<semaphore_mem>>) src(%69 : memref<1x128xf32, #tpu.memory_space<any>>) dst(%70 : memref<1x128xf32, #tpu.memory_space<vmem>>)
    %c4_i32_52 = arith.constant 4 : i32
    %c0_i32_53 = arith.constant 0 : i32
    %c0_i32_54 = arith.constant 0 : i32
    %73 = tpu.memref_slice %arg3[%c0_i32_53, %c0_i32_54] : memref<16x128xf32, #tpu.memory_space<any>> -> memref<1x128xf32, #tpu.memory_space<any>>
    %c4_i32_55 = arith.constant 4 : i32
    %c0_i32_56 = arith.constant 0 : i32
    %74 = tpu.memref_slice %arg5[%c4_i32_55, %c0_i32_56] : memref<8x128xf32, #tpu.memory_space<vmem>> -> memref<1x128xf32, #tpu.memory_space<vmem>>
    %75 = tpu.memref_slice %arg6[%c4_i32_52] : memref<8x!tpu.dma_semaphore, #tpu.memory_space<semaphore_mem>> -> memref<1x!tpu.dma_semaphore, #tpu.memory_space<semaphore_mem>>
    %76 = tpu.memref_squeeze %75 : memref<1x!tpu.dma_semaphore, #tpu.memory_space<semaphore_mem>> -> memref<!tpu.dma_semaphore, #tpu.memory_space<semaphore_mem>>
    tpu.wait_dma2 semaphore(%76 : memref<!tpu.dma_semaphore, #tpu.memory_space<semaphore_mem>>) src(%73 : memref<1x128xf32, #tpu.memory_space<any>>) dst(%74 : memref<1x128xf32, #tpu.memory_space<vmem>>)
    %c5_i32_57 = arith.constant 5 : i32
    %c0_i32_58 = arith.constant 0 : i32
    %c0_i32_59 = arith.constant 0 : i32
    %77 = tpu.memref_slice %arg3[%c0_i32_58, %c0_i32_59] : memref<16x128xf32, #tpu.memory_space<any>> -> memref<1x128xf32, #tpu.memory_space<any>>
    %c5_i32_60 = arith.constant 5 : i32
    %c0_i32_61 = arith.constant 0 : i32
    %78 = tpu.memref_slice %arg5[%c5_i32_60, %c0_i32_61] : memref<8x128xf32, #tpu.memory_space<vmem>> -> memref<1x128xf32, #tpu.memory_space<vmem>>
    %79 = tpu.memref_slice %arg6[%c5_i32_57] : memref<8x!tpu.dma_semaphore, #tpu.memory_space<semaphore_mem>> -> memref<1x!tpu.dma_semaphore, #tpu.memory_space<semaphore_mem>>
    %80 = tpu.memref_squeeze %79 : memref<1x!tpu.dma_semaphore, #tpu.memory_space<semaphore_mem>> -> memref<!tpu.dma_semaphore, #tpu.memory_space<semaphore_mem>>
    tpu.wait_dma2 semaphore(%80 : memref<!tpu.dma_semaphore, #tpu.memory_space<semaphore_mem>>) src(%77 : memref<1x128xf32, #tpu.memory_space<any>>) dst(%78 : memref<1x128xf32, #tpu.memory_space<vmem>>)
    %c6_i32_62 = arith.constant 6 : i32
    %c0_i32_63 = arith.constant 0 : i32
    %c0_i32_64 = arith.constant 0 : i32
    %81 = tpu.memref_slice %arg3[%c0_i32_63, %c0_i32_64] : memref<16x128xf32, #tpu.memory_space<any>> -> memref<1x128xf32, #tpu.memory_space<any>>
    %c6_i32_65 = arith.constant 6 : i32
    %c0_i32_66 = arith.constant 0 : i32
    %82 = tpu.memref_slice %arg5[%c6_i32_65, %c0_i32_66] : memref<8x128xf32, #tpu.memory_space<vmem>> -> memref<1x128xf32, #tpu.memory_space<vmem>>
    %83 = tpu.memref_slice %arg6[%c6_i32_62] : memref<8x!tpu.dma_semaphore, #tpu.memory_space<semaphore_mem>> -> memref<1x!tpu.dma_semaphore, #tpu.memory_space<semaphore_mem>>
    %84 = tpu.memref_squeeze %83 : memref<1x!tpu.dma_semaphore, #tpu.memory_space<semaphore_mem>> -> memref<!tpu.dma_semaphore, #tpu.memory_space<semaphore_mem>>
    tpu.wait_dma2 semaphore(%84 : memref<!tpu.dma_semaphore, #tpu.memory_space<semaphore_mem>>) src(%81 : memref<1x128xf32, #tpu.memory_space<any>>) dst(%82 : memref<1x128xf32, #tpu.memory_space<vmem>>)
    %c7_i32_67 = arith.constant 7 : i32
    %c0_i32_68 = arith.constant 0 : i32
    %c0_i32_69 = arith.constant 0 : i32
    %85 = tpu.memref_slice %arg3[%c0_i32_68, %c0_i32_69] : memref<16x128xf32, #tpu.memory_space<any>> -> memref<1x128xf32, #tpu.memory_space<any>>
    %c7_i32_70 = arith.constant 7 : i32
    %c0_i32_71 = arith.constant 0 : i32
    %86 = tpu.memref_slice %arg5[%c7_i32_70, %c0_i32_71] : memref<8x128xf32, #tpu.memory_space<vmem>> -> memref<1x128xf32, #tpu.memory_space<vmem>>
    %87 = tpu.memref_slice %arg6[%c7_i32_67] : memref<8x!tpu.dma_semaphore, #tpu.memory_space<semaphore_mem>> -> memref<1x!tpu.dma_semaphore, #tpu.memory_space<semaphore_mem>>
    %88 = tpu.memref_squeeze %87 : memref<1x!tpu.dma_semaphore, #tpu.memory_space<semaphore_mem>> -> memref<!tpu.dma_semaphore, #tpu.memory_space<semaphore_mem>>
    tpu.wait_dma2 semaphore(%88 : memref<!tpu.dma_semaphore, #tpu.memory_space<semaphore_mem>>) src(%85 : memref<1x128xf32, #tpu.memory_space<any>>) dst(%86 : memref<1x128xf32, #tpu.memory_space<vmem>>)
    %c0 = arith.constant 0 : index
    %c0_72 = arith.constant 0 : index
    %89 = vector.load %arg2[%c0, %c0_72] : memref<8x128xf32, #tpu.memory_space<vmem>>, vector<8x128xf32>
    %c0_73 = arith.constant 0 : index
    %c0_74 = arith.constant 0 : index
    %90 = vector.load %arg5[%c0_73, %c0_74] : memref<8x128xf32, #tpu.memory_space<vmem>>, vector<8x128xf32>
    %91 = arith.subf %89, %90 : vector<8x128xf32>
    %92 = arith.mulf %91, %91 : vector<8x128xf32>
    %cst = arith.constant dense<0.000000e+00> : vector<8xf32>
    %93 = vector.multi_reduction <add>, %92, %cst [1] : vector<8x128xf32> to vector<8xf32>
    %94 = vector.shape_cast %93 : vector<8xf32> to vector<8x1xf32>
    %c0_75 = arith.constant 0 : index
    %c0_76 = arith.constant 0 : index
    %95 = vector.load %arg4[%c0_75, %c0_76] : memref<8x1xf32, #tpu.memory_space<vmem>>, vector<8x1xf32>
    tpu.vector_store %arg4[%c0_75, %c0_76], %94 {strides = array<i32>} : memref<8x1xf32, #tpu.memory_space<vmem>>, vector<8x1xf32>,
    return
  }
  func.func @transform_0(%arg0: i32, %arg1: memref<8xi32, #tpu.memory_space<smem>>) -> (i32, i32) {
    %c0_i32 = arith.constant 0 : i32
    %c0_i32_0 = arith.constant 0 : i32
    return %arg0, %c0_i32 : i32, i32
  }
  func.func @transform_2(%arg0: i32, %arg1: memref<8xi32, #tpu.memory_space<smem>>) -> (i32, i32) {
    %c0_i32 = arith.constant 0 : i32
    %c0_i32_0 = arith.constant 0 : i32
    return %arg0, %c0_i32 : i32, i32
  }
}

</mosaic_0001>

<llo_original>
// kernel: tpu_custom_call.1
$region0: #{tpu_custom_call.1}
  #allocation0 [shape = 'u32[]', space=smem, size = 0x4, offset = 0x4, fixed_abs, tag = 'smem constant byte address 0x4 - core index']
  #allocation1 [shape = 'u32[144,128]{1,0:T(1,128)}', space=vmem, size = 0x12000, scoped, tag = 'internal scratch']
  #allocation2 [shape = 'f32[8,128]{1,0:T(8,128)}', space=vmem, size = 0x1000, scoped, tag = 'scratch operand']
  #allocation3 [shape = 's32[8]{0}', space=sflag, size = 0x20, scoped, tag = 'scratch operand']
  #allocation4 [shape = 's32[1]{0}', space=sflag, size = 0x4, scoped, tag = 'scoped memory for tpu_custom_call.1']
  #allocation5 [shape = 'u8[512]{0}', space=smem, size = 0x200, scoped, tag = 'prefetched SMEM operand 0']
  #allocation8 [shape = 's32[]', space=sflag, size = 0x4, offset = 0, fixed_abs, tag = 'sflag constant byte address 0x0 - dummy sync flag']
  #allocation9 [shape = 's32[]', space=sflag, size = 0x4, offset = 0, fixed_abs, tag = 'sflag constant byte address 0x0 - dummy sync flag']
  #allocation10 [shape = 'u32[]', space=smem, size = 0x4, offset = 0x44, fixed_abs, tag = 'smem constant byte address 0x44 - assertion arg 0']
  #allocation11 [shape = 'u32[]', space=smem, size = 0x4, offset = 0x48, fixed_abs, tag = 'smem constant byte address 0x48 - assertion arg 1']
  #allocation12 [shape = 's32[]', space=sflag, size = 0x4, offset = 0, fixed_abs, tag = 'sflag constant byte address 0x0 - dummy sync flag']
  #allocation13 [shape = 's32[]', space=sflag, size = 0x4, offset = 0, fixed_abs, tag = 'sflag constant byte address 0x0 - dummy sync flag']
  #allocation14 [shape = 's32[]', space=sflag, size = 0x4, offset = 0, fixed_abs, tag = 'sflag constant byte address 0x0 - dummy sync flag']
  #allocation15 [shape = 's32[]', space=sflag, size = 0x4, offset = 0, fixed_abs, tag = 'sflag constant byte address 0x0 - dummy sync flag']
  #allocation16 [shape = 's32[]', space=sflag, size = 0x4, offset = 0, fixed_abs, tag = 'sflag constant byte address 0x0 - dummy sync flag']
  #allocation17 [shape = 's32[]', space=sflag, size = 0x4, offset = 0, fixed_abs, tag = 'sflag constant byte address 0x0 - dummy sync flag']
  #allocation18 [shape = 's32[]', space=sflag, size = 0x4, offset = 0, fixed_abs, tag = 'sflag constant byte address 0x0 - dummy sync flag']
  #allocation19 [shape = 's32[]', space=sflag, size = 0x4, offset = 0, fixed_abs, tag = 'sflag constant byte address 0x0 - dummy sync flag']
  #allocation20 [shape = 's32[]', space=sflag, size = 0x4, offset = 0, fixed_abs, tag = 'sflag constant byte address 0x0 - dummy sync flag']
  #allocation21 [shape = 's32[]', space=sflag, size = 0x4, offset = 0, fixed_abs, tag = 'sflag constant byte address 0x0 - dummy sync flag']
  #allocation22 [shape = 's32[]', space=sflag, size = 0x4, offset = 0, fixed_abs, tag = 'sflag constant byte address 0x0 - dummy sync flag']
  #allocation23 [shape = 's32[]', space=sflag, size = 0x4, offset = 0, fixed_abs, tag = 'sflag constant byte address 0x0 - dummy sync flag']
  #allocation24 [shape = 's32[]', space=sflag, size = 0x4, offset = 0, fixed_abs, tag = 'sflag constant byte address 0x0 - dummy sync flag']
  #allocation25 [shape = 's32[]', space=sflag, size = 0x4, offset = 0, fixed_abs, tag = 'sflag constant byte address 0x0 - dummy sync flag']
  %s0 = inlined_call_operand.hbm [shape: s32[8], index: 0, kind: input, shape index: {}]
  %s1 = inlined_call_operand.hbm [shape: f32[8,128], index: 1, kind: input, shape index: {}]
  %s2 = inlined_call_operand.hbm [shape: f32[16,128], index: 2, kind: input, shape index: {}]
  %s3 = inlined_call_operand.vmem [shape: f32[8,1], index: 3, kind: output, shape index: {}]
  %s4 = sld [smem:[#allocation0]]
  $region50: #{tpu_custom_call.1} parent=0
    _
  %s6 = ssub.s32 1, %s4
  %s7 = scalar_select 0, %s6, %s4
  %9 = dma.hbm_to_smem %s0, 16, [#allocation5], [#allocation4]
  %10 = dma.done [#allocation4], 16
  %11 = sfence
  $region1: #{tpu_custom_call.1} parent=0
    #allocation6 [shape = 'u8[4096]{0}', space=vmem, size = 0x1000, scoped, tag = 'input window, operand 1, single buffered']
    #allocation7 [shape = 's32[1]{0}', space=sflag, size = 0x4, scoped, tag = 'scoped memory for tpu_custom_call.1']
    %12 = vsyncpa [#allocation7], 0
    // Predicated region
    $region2: #{tpu_custom_call.1} parent=1 // pred_check
      _
    $region3: #{tpu_custom_call.1} parent=1 // pred_check_branch
      %14 = sbr.rel (0) target = $region5
    $region4: #{tpu_custom_call.1} parent=1 // pred_region
      %s16 = ssub.s32 128, 128
      %17 = vsyncadd [#allocation7], %s16
      %s19 = sshll.u32 [#allocation6], 4
      %s20 = int_to_ptr.vmem [resolvable:$true] %s19
      %22 = dma.hbm_to_vmem [thread:$0]  %s1, 128, %s20, [#allocation7]
    $region5: #{tpu_custom_call.1} parent=1 // pred_fallthru
      _
    // Predicated region
    $region6: #{tpu_custom_call.1} parent=1 // pred_check
      _
    $region7: #{tpu_custom_call.1} parent=1 // pred_check_branch
      %24 = sbr.rel (0) target = $region9
    $region8: #{tpu_custom_call.1} parent=1 // pred_region
      %25 = dma.done [#allocation7], 128
    $region9: #{tpu_custom_call.1} parent=1 // pred_fallthru
      _
    %s26 = smul.u32 0, 8
    %s27 = sld [smem:[#allocation5 + %s26]]
    %s28 = smul.addr %s27, 16
    %s29 = scalar_lea.hbm %s2, %s28
    // Predicated region
    $region10: #{tpu_custom_call.1} parent=1 // pred_check
      _
    $region11: #{tpu_custom_call.1} parent=1 // pred_check_branch
      %31 = sbr.rel target = $region13
    $region12: #{tpu_custom_call.1} parent=1 // pred_region
      %32 = sst [smem:[#allocation10]] [#allocation9]
      %33 = sst [smem:[#allocation11]] [#allocation8]
    $region13: #{tpu_custom_call.1} parent=1 // pred_fallthru
      _
    %35 = shalt.err (0)
    %s37 = sshll.u32 [#allocation2], 4
    %s38 = int_to_ptr.vmem [resolvable:$true] %s37
    %40 = dma.hbm_to_vmem [thread:$0]  %s29, 16, %s38, [#allocation3]
    %s41 = sadd.s32 %s26, 1
    %s42 = sld [smem:[#allocation5 + %s41]]
    %s43 = smul.addr %s42, 16
    %s44 = scalar_lea.hbm %s2, %s43
    %s45 = scalar_lea.vmem [#allocation2], 1
    %s46 = scalar_lea.sflag [#allocation3], 1
    // Predicated region
    $region14: #{tpu_custom_call.1} parent=1 // pred_check
      _
    $region15: #{tpu_custom_call.1} parent=1 // pred_check_branch
      %48 = sbr.rel target = $region17
    $region16: #{tpu_custom_call.1} parent=1 // pred_region
      %49 = sst [smem:[#allocation10]] [#allocation13]
      %50 = sst [smem:[#allocation11]] [#allocation12]
    $region17: #{tpu_custom_call.1} parent=1 // pred_fallthru
      _
    %52 = shalt.err (0)
    %s54 = sshll.u32 %s45, 4
    %s55 = int_to_ptr.vmem [resolvable:$true] %s54
    %57 = dma.hbm_to_vmem [thread:$0]  %s44, 16, %s55, %s46
    %s58 = sadd.s32 %s26, 2
    %s59 = sld [smem:[#allocation5 + %s58]]
    %s60 = smul.addr %s59, 16
    %s61 = scalar_lea.hbm %s2, %s60
    %s62 = scalar_lea.vmem [#allocation2], 2
    %s63 = scalar_lea.sflag [#allocation3], 2
    // Predicated region
    $region18: #{tpu_custom_call.1} parent=1 // pred_check
      _
    $region19: #{tpu_custom_call.1} parent=1 // pred_check_branch
      %65 = sbr.rel target = $region21
    $region20: #{tpu_custom_call.1} parent=1 // pred_region
      %66 = sst [smem:[#allocation10]] [#allocation15]
      %67 = sst [smem:[#allocation11]] [#allocation14]
    $region21: #{tpu_custom_call.1} parent=1 // pred_fallthru
      _
    %69 = shalt.err (0)
    %s71 = sshll.u32 %s62, 4
    %s72 = int_to_ptr.vmem [resolvable:$true] %s71
    %74 = dma.hbm_to_vmem [thread:$0]  %s61, 16, %s72, %s63
    %s75 = sadd.s32 %s26, 3
    %s76 = sld [smem:[#allocation5 + %s75]]
    %s77 = smul.addr %s76, 16
    %s78 = scalar_lea.hbm %s2, %s77
    %s79 = scalar_lea.vmem [#allocation2], 3
    %s80 = scalar_lea.sflag [#allocation3], 3
    // Predicated region
    $region22: #{tpu_custom_call.1} parent=1 // pred_check
      _
    $region23: #{tpu_custom_call.1} parent=1 // pred_check_branch
      %82 = sbr.rel target = $region25
    $region24: #{tpu_custom_call.1} parent=1 // pred_region
      %83 = sst [smem:[#allocation10]] [#allocation17]
      %84 = sst [smem:[#allocation11]] [#allocation16]
    $region25: #{tpu_custom_call.1} parent=1 // pred_fallthru
      _
    %86 = shalt.err (0)
    %s88 = sshll.u32 %s79, 4
    %s89 = int_to_ptr.vmem [resolvable:$true] %s88
    %91 = dma.hbm_to_vmem [thread:$0]  %s78, 16, %s89, %s80
    %s92 = sadd.s32 %s26, 4
    %s93 = sld [smem:[#allocation5 + %s92]]
    %s94 = smul.addr %s93, 16
    %s95 = scalar_lea.hbm %s2, %s94
    %s96 = scalar_lea.vmem [#allocation2], 4
    %s97 = scalar_lea.sflag [#allocation3], 4
    // Predicated region
    $region26: #{tpu_custom_call.1} parent=1 // pred_check
      _
    $region27: #{tpu_custom_call.1} parent=1 // pred_check_branch
      %99 = sbr.rel target = $region29
    $region28: #{tpu_custom_call.1} parent=1 // pred_region
      %100 = sst [smem:[#allocation10]] [#allocation19]
      %101 = sst [smem:[#allocation11]] [#allocation18]
    $region29: #{tpu_custom_call.1} parent=1 // pred_fallthru
      _
    %103 = shalt.err (0)
    %s105 = sshll.u32 %s96, 4
    %s106 = int_to_ptr.vmem [resolvable:$true] %s105
    %108 = dma.hbm_to_vmem [thread:$0]  %s95, 16, %s106, %s97
    %s109 = sadd.s32 %s26, 5
    %s110 = sld [smem:[#allocation5 + %s109]]
    %s111 = smul.addr %s110, 16
    %s112 = scalar_lea.hbm %s2, %s111
    %s113 = scalar_lea.vmem [#allocation2], 5
    %s114 = scalar_lea.sflag [#allocation3], 5
    // Predicated region
    $region30: #{tpu_custom_call.1} parent=1 // pred_check
      _
    $region31: #{tpu_custom_call.1} parent=1 // pred_check_branch
      %116 = sbr.rel target = $region33
    $region32: #{tpu_custom_call.1} parent=1 // pred_region
      %117 = sst [smem:[#allocation10]] [#allocation21]
      %118 = sst [smem:[#allocation11]] [#allocation20]
    $region33: #{tpu_custom_call.1} parent=1 // pred_fallthru
      _
    %120 = shalt.err (0)
    %s122 = sshll.u32 %s113, 4
    %s123 = int_to_ptr.vmem [resolvable:$true] %s122
    %125 = dma.hbm_to_vmem [thread:$0]  %s112, 16, %s123, %s114
    %s126 = sadd.s32 %s26, 6
    %s127 = sld [smem:[#allocation5 + %s126]]
    %s128 = smul.addr %s127, 16
    %s129 = scalar_lea.hbm %s2, %s128
    %s130 = scalar_lea.vmem [#allocation2], 6
    %s131 = scalar_lea.sflag [#allocation3], 6
    // Predicated region
    $region34: #{tpu_custom_call.1} parent=1 // pred_check
      _
    $region35: #{tpu_custom_call.1} parent=1 // pred_check_branch
      %133 = sbr.rel target = $region37
    $region36: #{tpu_custom_call.1} parent=1 // pred_region
      %134 = sst [smem:[#allocation10]] [#allocation23]
      %135 = sst [smem:[#allocation11]] [#allocation22]
    $region37: #{tpu_custom_call.1} parent=1 // pred_fallthru
      _
    %137 = shalt.err (0)
    %s139 = sshll.u32 %s130, 4
    %s140 = int_to_ptr.vmem [resolvable:$true] %s139
    %142 = dma.hbm_to_vmem [thread:$0]  %s129, 16, %s140, %s131
    %s143 = sadd.s32 %s26, 7
    %s144 = sld [smem:[#allocation5 + %s143]]
    %s145 = smul.addr %s144, 16
    %s146 = scalar_lea.hbm %s2, %s145
    %s147 = scalar_lea.vmem [#allocation2], 7
    %s148 = scalar_lea.sflag [#allocation3], 7
    // Predicated region
    $region38: #{tpu_custom_call.1} parent=1 // pred_check
      _
    $region39: #{tpu_custom_call.1} parent=1 // pred_check_branch
      %150 = sbr.rel target = $region41
    $region40: #{tpu_custom_call.1} parent=1 // pred_region
      %151 = sst [smem:[#allocation10]] [#allocation25]
      %152 = sst [smem:[#allocation11]] [#allocation24]
    $region41: #{tpu_custom_call.1} parent=1 // pred_fallthru
      _
    %154 = shalt.err (0)
    %s156 = sshll.u32 %s147, 4
    %s157 = int_to_ptr.vmem [resolvable:$true] %s156
    %159 = dma.hbm_to_vmem [thread:$0]  %s146, 16, %s157, %s148
    %s160 = smul.u32 1, 1
    %s161 = sshll.u32 %s160, 4
    %162 = dma.done [#allocation3], %s161
    %s163 = sshll.u32 %s160, 4
    %164 = dma.done %s46, %s163
    %s165 = sshll.u32 %s160, 4
    %166 = dma.done %s63, %s165
    %s167 = sshll.u32 %s160, 4
    %168 = dma.done %s80, %s167
    %s169 = sshll.u32 %s160, 4
    %170 = dma.done %s97, %s169
    %s171 = sshll.u32 %s160, 4
    %172 = dma.done %s114, %s171
    %s173 = sshll.u32 %s160, 4
    %174 = dma.done %s131, %s173
    %s175 = sshll.u32 %s160, 4
    %176 = dma.done %s148, %s175
    %v177 = vld [vmem:[#allocation6] sm:$0xff]
    %v178 = vld [vmem:[#allocation2] sm:$0xff]
    %v179 = vsub.f32 %v177, %v178
    %v180 = vmul.f32 %v179, %v179
    %181 = vadd.xlane.f32.xlu0 %v180
    %v182 = vpop.xlane.xlu0 %181
    %vm183 = vcmask 7168
    %184 = vst.msk [vmem:[%s3] sm:$0xff] %vm183, %v182
    // Predicated region
    $region42: #{tpu_custom_call.1} parent=1 // pred_check
      _
    $region43: #{tpu_custom_call.1} parent=1 // pred_check_branch
      %186 = sbr.rel (0) target = $region45
    $region44: #{tpu_custom_call.1} parent=1 // pred_region
      _
    $region45: #{tpu_custom_call.1} parent=1 // pred_fallthru
      _
    // Predicated region
    $region46: #{tpu_custom_call.1} parent=1 // pred_check
      _
    $region47: #{tpu_custom_call.1} parent=1 // pred_check_branch
      %188 = sbr.rel (0) target = $region49
    $region48: #{tpu_custom_call.1} parent=1 // pred_region
      _
    $region49: #{tpu_custom_call.1} parent=1 // pred_fallthru
      _
    %189 = vsyncpa [#allocation7], 1
  %190 = vsyncmov [#allocation3]
  %s191 = vpop.sfrf %190
  %p192 = scmp.eq.s32.totalorder %s191, 0
  %p193 = pneg %p192
  %195 = shalt.err (%p193)
  %s196 = scalar_lea.sflag [#allocation3], 1
  %197 = vsyncmov %s196
  %s198 = vpop.sfrf %197
  %p199 = scmp.eq.s32.totalorder %s198, 0
  %p200 = pneg %p199
  %202 = shalt.err (%p200)
  %s203 = scalar_lea.sflag [#allocation3], 2
  %204 = vsyncmov %s203
  %s205 = vpop.sfrf %204
  %p206 = scmp.eq.s32.totalorder %s205, 0
  %p207 = pneg %p206
  %209 = shalt.err (%p207)
  %s210 = scalar_lea.sflag [#allocation3], 3
  %211 = vsyncmov %s210
  %s212 = vpop.sfrf %211
  %p213 = scmp.eq.s32.totalorder %s212, 0
  %p214 = pneg %p213
  %216 = shalt.err (%p214)
  %s217 = scalar_lea.sflag [#allocation3], 4
  %218 = vsyncmov %s217
  %s219 = vpop.sfrf %218
  %p220 = scmp.eq.s32.totalorder %s219, 0
  %p221 = pneg %p220
  %223 = shalt.err (%p221)
  %s224 = scalar_lea.sflag [#allocation3], 5
  %225 = vsyncmov %s224
  %s226 = vpop.sfrf %225
  %p227 = scmp.eq.s32.totalorder %s226, 0
  %p228 = pneg %p227
  %230 = shalt.err (%p228)
  %s231 = scalar_lea.sflag [#allocation3], 6
  %232 = vsyncmov %s231
  %s233 = vpop.sfrf %232
  %p234 = scmp.eq.s32.totalorder %s233, 0
  %p235 = pneg %p234
  %237 = shalt.err (%p235)
  %s238 = scalar_lea.sflag [#allocation3], 7
  %239 = vsyncmov %s238
  %s240 = vpop.sfrf %239
  %p241 = scmp.eq.s32.totalorder %s240, 0
  %p242 = pneg %p241
  %244 = shalt.err (%p242)

</llo_original>
